<compile_context>
chip_gen: v5e
topology: v5e:2x2
jax: 0.10.0
libtpu: 0.0.40
codegen_flags: <defaults>
</compile_context>

<pallas_src>
import jax
import jax.numpy as jnp
from jax import lax
from jax.experimental import pallas as pl
from jax.experimental.pallas import tpu as pltpu

EPS = 1e-07

# Budget for the in-kernel (BP, QT) bf16 one-hot intermediate.
_ONEHOT_VMEM_BUDGET = 8 * 1024 * 1024


# ----------------------------------------------------------------------------
# Plain-JAX setup glue: reproduces _CatmullRomSpline.__init__ (builds ts and
# arc_lengths tables used by forward()).
# ----------------------------------------------------------------------------
def _sample_points(tq, t, aux):
    """tq: (B, M) query params; t: (B, K) knots; aux: (B, K, 2) aux control pts."""
    B, M = tq.shape
    c1 = t[:, 1:-2]                                   # (B, K-3)
    c2 = t[:, 2:-1]
    inseg = (c1[:, None, :] <= tq[:, :, None]) & (tq[:, :, None] < c2[:, None, :])
    j = jnp.argmax(inseg, axis=-1).astype(jnp.int32)  # (B, M) segment index

    def take_t(off):
        return jnp.take_along_axis(t, j + off, axis=1)[..., None]       # (B, M, 1)

    def take_aux(off):
        idx = jnp.broadcast_to((j + off)[:, :, None], (B, M, 2))
        return jnp.take_along_axis(aux, idx, axis=1)                     # (B, M, 2)

    t0, t1, t2, t3 = take_t(0), take_t(1), take_t(2), take_t(3)
    aux0, aux1, aux2 = take_aux(0), take_aux(1), take_aux(2)
    aux3 = aux2  # reproduces original module exactly (it reuses idx12 for aux3)

    tq_e = tq[:, :, None]
    t0t, t1t, t2t, t3t = t0 - tq_e, t1 - tq_e, t2 - tq_e, t3 - tq_e
    x01 = (t1t * aux0 - t0t * aux1) / (t1 - t0)
    x12 = (t2t * aux1 - t1t * aux2) / (t2 - t1)
    x23 = (t3t * aux2 - t2t * aux3) / (t3 - t2)
    x012 = (t2t * x01 - t0t * x12) / (t2 - t0)
    x123 = (t3t * x12 - t1t * x23) / (t3 - t1)
    return (t2t * x012 - t1t * x123) / (t2 - t1)


def build_catmull_rom(cps, p_num=100, alpha=0.5):
    """Returns (ts, arc_lengths), each of shape (B, npoints) float32."""
    cps = cps.astype(jnp.float32)
    B, _, _ = cps.shape
    cps = jnp.concatenate([cps, cps[:, 0:1, :]], axis=1)               # close loop
    zeros = jnp.zeros((B, 1, 2), jnp.float32)
    aux = jnp.concatenate([zeros, cps, zeros], axis=1)

    cps_01 = cps[:, 0, :] - cps[:, 1, :]
    cps_last_01 = cps[:, -1, :] - cps[:, -2, :]
    l_01 = jnp.sqrt(jnp.sum(cps_01 ** 2, axis=1, keepdims=True) + EPS)
    l_last_01 = jnp.sqrt(jnp.sum(cps_last_01 ** 2, axis=1, keepdims=True) + EPS)
    aux = aux.at[:, 0, :].set(cps[:, 0, :] - l_01 / l_last_01 * cps_last_01)
    aux = aux.at[:, -1, :].set(cps[:, -1, :] - l_last_01 / l_01 * cps_01)

    diff = jnp.sum((aux[:, 1:, :] - aux[:, :-1, :]) ** 2, axis=-1) ** (alpha / 2.0)
    t = jnp.concatenate(
        [jnp.zeros((B, 1), jnp.float32), jnp.cumsum(diff, axis=-1)], axis=-1)

    start = t[:, 1:-2]                                                  # (B, cp_num)
    end = t[:, 2:-1] - 0.01
    frac = jnp.arange(p_num, dtype=jnp.float32) / float(p_num - 1)
    ts = start[..., None] + (end - start)[..., None] * frac             # (B, cp_num, p_num)
    ts = ts.reshape(B, -1)                                              # (B, npoints)

    pts = _sample_points(ts, t, aux)                                    # (B, npoints, 2)
    dpts = pts[:, 1:, :] - pts[:, :-1, :]
    dist = jnp.sqrt(jnp.sum(dpts ** 2, axis=-1) + EPS)
    arc_lengths = jnp.concatenate(
        [jnp.zeros((B, 1), jnp.float32), jnp.cumsum(dist, axis=-1)], axis=1)
    return ts, arc_lengths


# ----------------------------------------------------------------------------
# Pallas kernel: the forward() hot path (table gather + linear interpolation).
# ----------------------------------------------------------------------------
def _spline_forward_kernel(tab_ref, s_ref, f1_ref, out_ref):
    # tab_ref : (16, BP_pad) bf16 limb table; rows (3 bf16 limbs each, exact):
    #           0..2 = s0(hi,mid,lo), 3..5 = t0, 6..8 = slope, 9..15 = zeros.
    # s_ref   : (1, 1, QT)  f32   query arc-lengths (lane-dense)
    # f1_ref  : (1, 1, QT)  int32 flat table index i0 * npoints + i1
    # out_ref : (1, 1, QT)  f32
    bp = tab_ref.shape[1]
    qt = s_ref.shape[-1]

    s = s_ref[0]                                     # (1, QT) f32
    f1 = f1_ref[0]                                   # (1, QT) int32

    # One-hot gather matrix in bf16: table entries along sublanes, queries
    # along lanes. Exact 0.0 / 1.0, half the VMEM traffic of an f32 one-hot.
    rows = lax.broadcasted_iota(jnp.int32, (bp, qt), 0)
    onehot = (rows == f1).astype(jnp.bfloat16)       # (BP, QT)
    # TODO(synk): if the one-hot construction (iota+cmp+select over BP*QT)
    # becomes the binding VALU slot, feed a precomputed row-index array
    # (constant index_map, VMEM-resident) instead of regenerating the iota.

    # Single native bf16 MXU pass: (16, BP) @ (BP, QT) -> (16, QT) f32.
    # Each gathered limb is exact (bf16*bf16 products fit in f32; one-hot RHS),
    # and the 3-limb f32 sums below reconstruct the original f32 values exactly.
    gath = jnp.dot(tab_ref[...], onehot, preferred_element_type=jnp.float32)

    s0 = gath[0:1, :] + gath[1:2, :] + gath[2:3, :]
    t0 = gath[3:4, :] + gath[4:5, :] + gath[5:6, :]
    slope = gath[6:7, :] + gath[7:8, :] + gath[8:9, :]

    out_ref[0] = t0 + (s - s0) * slope


def _split_bf16_limbs(x_f32):
    """Split f32 vector into 3 bf16 limbs with exact reconstruction hi+mid+lo."""
    hi = x_f32.astype(jnp.bfloat16)
    r1 = x_f32 - hi.astype(jnp.float32)
    mid = r1.astype(jnp.bfloat16)
    r2 = r1 - mid.astype(jnp.float32)
    lo = r2.astype(jnp.bfloat16)
    return hi, mid, lo


def _has_two_tensorcores():
    """Best-effort detection of chips exposing 2 TensorCores per device."""
    try:
        kind = jax.devices()[0].device_kind.lower()
    except Exception:
        return False
    if "v7" in kind:
        return True
    if "v4" in kind and "lite" not in kind:
        return True
    if "v5p" in kind or "v5 p" in kind:
        return True
    return False


def spline_forward(s, i0, i1, ts, arc_lengths, *, queries_per_step=2048):
    """Pallas-backed _CatmullRomSpline.forward(s, [i0, i1])."""
    B, npoints = arc_lengths.shape
    orig_shape = s.shape

    # --- table prep (done once per spline, plain XLA) ------------------------
    arc = arc_lengths.astype(jnp.float32)
    tsf = ts.astype(jnp.float32)
    nxt = (jnp.arange(npoints, dtype=jnp.int32) + 1) % npoints
    arc_next = arc[:, nxt]            # arc_lengths[:, (j+1) % npoints]
    ts_next = tsf[:, nxt]

    bp = B * npoints
    # Pad the flattened (contraction) axis to 256 to fill the 256x256 MXUs on
    # v6e/v7x (harmless on v5e's 128x128 arrays).
    bp_pad = -(-bp // 256) * 256

    arc_flat = arc.reshape(-1)
    ts_flat = tsf.reshape(-1)
    # Precompute the interpolation slope once per table entry: the per-query
    # divide disappears from the kernel. (Same f32 division the module does.)
    slope_flat = (ts_next.reshape(-1) - ts_flat) / (arc_next.reshape(-1) - arc_flat)

    def _pad(v):
        return jnp.pad(v, (0, bp_pad - bp))

    limb_rows = []
    for row in (_pad(arc_flat), _pad(ts_flat), _pad(slope_flat)):
        limb_rows.extend(_split_bf16_limbs(row))
    zero_row = jnp.zeros((bp_pad,), jnp.bfloat16)
    tab = jnp.stack(limb_rows + [zero_row] * 7, axis=0)   # (16, bp_pad) bf16 tile
    # TODO(synk): for B*npoints >~ 4K the O(N * B*npoints) one-hot gather is the
    # wrong algorithm; switch to scalar-prefetched indices + per-query dynamic
    # indexing / DMA gather (or chunk BP over a second grid axis) instead.

    # --- query prep: lane-dense layout, flat index precomputed --------------
    sf = s.reshape(-1).astype(jnp.float32)
    f1 = (i0.reshape(-1).astype(jnp.int32) * npoints
          + i1.reshape(-1).astype(jnp.int32))
    f1 = jnp.clip(f1, 0, bp - 1)      # guard against OOB indices (undefined in ref)

    n = sf.shape[0]
    n128 = -(-n // 128) * 128

    # Tile size: as big as possible subject to (a) requested queries_per_step,
    # (b) the bf16 one-hot VMEM budget bp_pad * qt * 2B <= ~8 MiB.
    max_qt_vmem = max(128, (_ONEHOT_VMEM_BUDGET // (2 * bp_pad)) // 128 * 128)
    qt = max(128, (min(int(queries_per_step), max_qt_vmem) // 128) * 128)
    qt = min(qt, n128)

    # Generation-aware splitting: single-TC chips (v5e/v6e) run the fewest
    # steps possible; 2-TC chips (v4/v5p/v7x) target an even grid with >= 2
    # steps per core so intra-core double-buffering actually overlaps.
    if _has_two_tensorcores():
        desired = 4 if n128 >= 4 * 128 else (2 if n128 >= 2 * 128 else 1)
        if n128 // qt < desired:
            qt = max(128, ((n128 // desired) // 128) * 128)

    n_pad = -(-n // qt) * qt
    pad = n_pad - n
    sf = jnp.pad(sf, (0, pad))        # padded lanes: s = 0
    f1 = jnp.pad(f1, (0, pad))        # padded lanes: valid flat index 0 (finite slope)

    g = n_pad // qt
    s_in = sf.reshape(g, 1, qt)
    f1_in = f1.reshape(g, 1, qt)

    out = pl.pallas_call(
        _spline_forward_kernel,
        out_shape=jax.ShapeDtypeStruct((g, 1, qt), jnp.float32),
        grid_spec=pltpu.PrefetchScalarGridSpec(
            num_scalar_prefetch=0,
            grid=(g,),
            in_specs=[
                # full stacked limb table, VMEM-resident for every grid step
                # (constant block index => fetched once by the pipeline).
                # TODO(synk): single-buffer via pipeline_mode=pl.Buffered(1)
                # once that path is validated; saving is negligible at this BP.
                pl.BlockSpec((16, bp_pad), lambda i: (0, 0)),
                # lane-dense query tiles (queries on the 128-lane axis)
                pl.BlockSpec((1, 1, qt), lambda i: (i, 0, 0)),
                pl.BlockSpec((1, 1, qt), lambda i: (i, 0, 0)),
            ],
            out_specs=pl.BlockSpec((1, 1, qt), lambda i: (i, 0, 0)),
        ),
        compiler_params=pltpu.CompilerParams(
            dimension_semantics=("parallel",),
            # explicit scoped-VMEM budget: safe on v5e/v6e (128 MiB physical)
            # and within v7x's 64 MiB physical VMEM; the one-hot is capped to
            # ~8 MiB by the qt selection above.
            vmem_limit_bytes=32 * 1024 * 1024,
        ),
    )(tab, s_in, f1_in)

    return out.reshape(-1)[:n].reshape(orig_shape)


# ----------------------------------------------------------------------------
# Pure-JAX reference of forward() for verification.
# ----------------------------------------------------------------------------
def forward_ref(s, i0, i1, ts, arc_lengths):
    npoints = arc_lengths.shape[1]
    i2 = (i1 + 1) % npoints
    s0 = arc_lengths[i0, i1].reshape(s.shape)
    s1 = arc_lengths[i0, i2].reshape(s.shape)
    t0 = ts[i0, i1].reshape(s.shape)
    t1 = ts[i0, i2].reshape(s.shape)
    return t0 + (s - s0) * (t1 - t0) / (s1 - s0)


if __name__ == "__main__":
    key = jax.random.PRNGKey(0)
    k1, k2, k3, k4, k5 = jax.random.split(key, 5)

    # Deterministic "control point" parameters (module __init__ input): two
    # batches of 4 control points each, placed on noisy circles so the spline
    # is non-degenerate.
    B, cp_num, p_num = 2, 4, 32
    angles = jnp.arange(cp_num, dtype=jnp.float32) / cp_num * 2.0 * jnp.pi
    unit = jnp.stack([jnp.cos(angles), jnp.sin(angles)], axis=-1)[None]        # (1, cp_num, 2)
    radii = 3.0 + jax.random.uniform(k1, (B, 1, 1), minval=0.0, maxval=1.0)
    centers = jax.random.uniform(k2, (B, 1, 2), minval=-1.0, maxval=1.0)
    cps = unit * radii + centers                                               # (B, cp_num, 2)

    ts, arc_lengths = build_catmull_rom(cps, p_num=p_num, alpha=0.5)
    npoints = arc_lengths.shape[1]        # cp_num * p_num = 128

    # forward() inputs: arc-length targets s and segment indices sgs = [i0, i1]
    N = 256
    i0 = jax.random.randint(k3, (N, 1), 0, B, dtype=jnp.int32)
    i1 = jax.random.randint(k4, (N, 1), 0, npoints - 1, dtype=jnp.int32)
    frac = jax.random.uniform(k5, (N, 1), dtype=jnp.float32)
    i2 = (i1 + 1) % npoints
    s_lo = arc_lengths[i0[:, 0], i1[:, 0]][:, None]
    s_hi = arc_lengths[i0[:, 0], i2[:, 0]][:, None]
    s = s_lo + frac * (s_hi - s_lo)                                            # (N, 1) f32

    out = spline_forward(s, i0, i1, ts, arc_lengths)
    out = jax.block_until_ready(out)

    ref = forward_ref(s, i0.reshape(-1), i1.reshape(-1), ts, arc_lengths)
    assert out.shape == s.shape and out.dtype == jnp.float32
    assert jnp.allclose(out, ref, rtol=1e-5, atol=1e-5)
    print("KERNEL_OK")
</pallas_src>

<mosaic_0001>
module attributes {stable_mosaic.version = 11 : i64} {
  func.func @_spline_forward_kernel(%arg0: i32, %arg1: memref<16x256xbf16, #tpu.memory_space<vmem>>, %arg2: memref<1x1x256xf32, #tpu.memory_space<vmem>>, %arg3: memref<1x1x256xi32, #tpu.memory_space<vmem>>, %arg4: memref<1x1x256xf32, #tpu.memory_space<vmem>>) attributes {dimension_semantics = [#tpu.dimension_semantics<parallel>], iteration_bounds = array<i64: 1>, scalar_prefetch = 0 : i64, scratch_operands = 0 : i64, tpu.core_type = #tpu.core_type<tc>, window_params = [{pipeline_mode = #tpu.pipeline_mode<synchronous>, transform_indices = @transform_0, window_bounds = array<i64: 16, 256>}, {transform_indices = @transform_1, window_bounds = array<i64: 1, 1, 256>}, {transform_indices = @transform_2, window_bounds = array<i64: 1, 1, 256>}, {transform_indices = @transform_3, window_bounds = array<i64: 1, 1, 256>}]} {
    %c0 = arith.constant 0 : index
    %c0_0 = arith.constant 0 : index
    %c0_1 = arith.constant 0 : index
    %0 = vector.load %arg2[%c0, %c0_0, %c0_1] : memref<1x1x256xf32, #tpu.memory_space<vmem>>, vector<1x1x256xf32>
    %1 = vector.shape_cast %0 : vector<1x1x256xf32> to vector<1x256xf32>
    %c0_2 = arith.constant 0 : index
    %c0_3 = arith.constant 0 : index
    %c0_4 = arith.constant 0 : index
    %2 = vector.load %arg3[%c0_2, %c0_3, %c0_4] : memref<1x1x256xi32, #tpu.memory_space<vmem>>, vector<1x1x256xi32>
    %3 = vector.shape_cast %2 : vector<1x1x256xi32> to vector<1x256xi32>
    %4 = tpu.iota {dimensions = array<i32: 0>} : vector<256x256xi32>
    %5 = vector.broadcast %3 : vector<1x256xi32> to vector<256x256xi32>
    %6 = arith.cmpi eq, %4, %5 : vector<256x256xi32>
    %7 = arith.extui %6 : vector<256x256xi1> to vector<256x256xi32>
    %8 = arith.sitofp %7 : vector<256x256xi32> to vector<256x256xf32>
    %9 = arith.truncf %8 : vector<256x256xf32> to vector<256x256xbf16>
    %c0_5 = arith.constant 0 : index
    %c0_6 = arith.constant 0 : index
    %10 = vector.load %arg1[%c0_5, %c0_6] : memref<16x256xbf16, #tpu.memory_space<vmem>>, vector<16x256xbf16>
    %cst = arith.constant dense<0.000000e+00> : vector<16x256xf32>
    %11 = tpu.matmul %10, %9, %cst {dimension_numbers = #tpu.dot_dimension_numbers<[1], [0], [0], [1], [0, 0, 1, 1], [], []>} : vector<16x256xbf16>, vector<256x256xbf16>, vector<16x256xf32> -> vector<16x256xf32>
    %12 = vector.extract_strided_slice %11 {offsets = [0, 0], sizes = [1, 256], strides = [1, 1]} : vector<16x256xf32> to vector<1x256xf32>
    %13 = vector.extract_strided_slice %11 {offsets = [1, 0], sizes = [1, 256], strides = [1, 1]} : vector<16x256xf32> to vector<1x256xf32>
    %14 = arith.addf %12, %13 : vector<1x256xf32>
    %15 = vector.extract_strided_slice %11 {offsets = [2, 0], sizes = [1, 256], strides = [1, 1]} : vector<16x256xf32> to vector<1x256xf32>
    %16 = arith.addf %14, %15 : vector<1x256xf32>
    %17 = vector.extract_strided_slice %11 {offsets = [3, 0], sizes = [1, 256], strides = [1, 1]} : vector<16x256xf32> to vector<1x256xf32>
    %18 = vector.extract_strided_slice %11 {offsets = [4, 0], sizes = [1, 256], strides = [1, 1]} : vector<16x256xf32> to vector<1x256xf32>
    %19 = arith.addf %17, %18 : vector<1x256xf32>
    %20 = vector.extract_strided_slice %11 {offsets = [5, 0], sizes = [1, 256], strides = [1, 1]} : vector<16x256xf32> to vector<1x256xf32>
    %21 = arith.addf %19, %20 : vector<1x256xf32>
    %22 = vector.extract_strided_slice %11 {offsets = [6, 0], sizes = [1, 256], strides = [1, 1]} : vector<16x256xf32> to vector<1x256xf32>
    %23 = vector.extract_strided_slice %11 {offsets = [7, 0], sizes = [1, 256], strides = [1, 1]} : vector<16x256xf32> to vector<1x256xf32>
    %24 = arith.addf %22, %23 : vector<1x256xf32>
    %25 = vector.extract_strided_slice %11 {offsets = [8, 0], sizes = [1, 256], strides = [1, 1]} : vector<16x256xf32> to vector<1x256xf32>
    %26 = arith.addf %24, %25 : vector<1x256xf32>
    %27 = arith.subf %1, %16 : vector<1x256xf32>
    %28 = arith.mulf %27, %26 : vector<1x256xf32>
    %29 = arith.addf %21, %28 : vector<1x256xf32>
    %c0_7 = arith.constant 0 : index
    %c0_8 = arith.constant 0 : index
    %c0_9 = arith.constant 0 : index
    %30 = vector.load %arg4[%c0_7, %c0_8, %c0_9] : memref<1x1x256xf32, #tpu.memory_space<vmem>>, vector<1x1x256xf32>
    %31 = vector.shape_cast %30 : vector<1x1x256xf32> to vector<1x256xf32>
    %32 = vector.shape_cast %29 : vector<1x256xf32> to vector<1x1x256xf32>
    tpu.vector_store %arg4[%c0_7, %c0_8, %c0_9], %32 {strides = array<i32>} : memref<1x1x256xf32, #tpu.memory_space<vmem>>, vector<1x1x256xf32>,
    return
  }
  func.func @transform_0(%arg0: i32) -> (i32, i32) {
    %c0_i32 = arith.constant 0 : i32
    %c0_i32_0 = arith.constant 0 : i32
    %c0_i32_1 = arith.constant 0 : i32
    return %c0_i32, %c0_i32_0 : i32, i32
  }
  func.func @transform_1(%arg0: i32) -> (i32, i32, i32) {
    %c0_i32 = arith.constant 0 : i32
    %c0_i32_0 = arith.constant 0 : i32
    %c0_i32_1 = arith.constant 0 : i32
    return %arg0, %c0_i32, %c0_i32_0 : i32, i32, i32
  }
  func.func @transform_2(%arg0: i32) -> (i32, i32, i32) {
    %c0_i32 = arith.constant 0 : i32
    %c0_i32_0 = arith.constant 0 : i32
    %c0_i32_1 = arith.constant 0 : i32
    return %arg0, %c0_i32, %c0_i32_0 : i32, i32, i32
  }
  func.func @transform_3(%arg0: i32) -> (i32, i32, i32) {
    %c0_i32 = arith.constant 0 : i32
    %c0_i32_0 = arith.constant 0 : i32
    %c0_i32_1 = arith.constant 0 : i32
    return %arg0, %c0_i32, %c0_i32_0 : i32, i32, i32
  }
}

</mosaic_0001>

<llo_original>
// kernel: tpu_custom_call.1
$region0: #{tpu_custom_call.1}
  #allocation0 [shape = 'u32[]', space=smem, size = 0x4, offset = 0x4, fixed_abs, tag = 'smem constant byte address 0x4 - core index']
  #allocation1 [shape = 'u32[72,128]{1,0:T(1,128)}', space=vmem, size = 0x9000, scoped, tag = 'internal scratch']
  %s0 = inlined_call_operand.hbm [shape: bf16[16,256], index: 0, kind: input, shape index: {}]
  %s1 = inlined_call_operand.hbm [shape: f32[1,1,256], index: 1, kind: input, shape index: {}]
  %s2 = inlined_call_operand.hbm [shape: s32[1,1,256], index: 2, kind: input, shape index: {}]
  %s3 = inlined_call_operand.hbm [shape: f32[1,1,256], index: 3, kind: output, shape index: {}]
  %s4 = sld [smem:[#allocation0]]
  $region34: #{tpu_custom_call.1} parent=0
    _
  %s6 = ssub.s32 1, %s4
  %s7 = scalar_select 0, %s6, %s4
  $region1: #{tpu_custom_call.1} parent=0
    #allocation2 [shape = 'u8[8192]{0}', space=vmem, size = 0x2000, scoped, tag = 'input window, operand 0, single buffered']
    #allocation3 [shape = 's32[1]{0}', space=sflag, size = 0x4, scoped, tag = 'scoped memory for tpu_custom_call.1']
    #allocation4 [shape = 's32[1]{0}', space=sflag, size = 0x4, scoped, tag = 'scoped memory for tpu_custom_call.1']
    #allocation5 [shape = 'u8[1024]{0}', space=vmem, size = 0x400, scoped, tag = 'input window, operand 1, single buffered']
    #allocation6 [shape = 's32[1]{0}', space=sflag, size = 0x4, scoped, tag = 'scoped memory for tpu_custom_call.1']
    #allocation7 [shape = 'u8[1024]{0}', space=vmem, size = 0x400, scoped, tag = 'input window, operand 2, single buffered']
    #allocation8 [shape = 'u8[1024]{0}', space=vmem, size = 0x400, scoped, tag = 'output window, operand 0, single buffered']
    %8 = vsyncpa [#allocation3], 0
    %9 = vsyncpa [#allocation6], 0
    %10 = vsyncpa [#allocation4], 0
    // Predicated region
    $region2: #{tpu_custom_call.1} parent=1 // pred_check
      _
    $region3: #{tpu_custom_call.1} parent=1 // pred_check_branch
      %12 = sbr.rel (0) target = $region5
    $region4: #{tpu_custom_call.1} parent=1 // pred_region
      %14 = vsyncadd [#allocation3], 0
      %s15 = sshll.u32 %s0, 4
      %s16 = int_to_ptr.hbm [resolvable:$true] %s15
      %s17 = sshll.u32 [#allocation2], 4
      %s18 = int_to_ptr.vmem [resolvable:$true] %s17
      %23 = dma.hbm_to_vmem [thread:$0]  %s16, 256, %s18, [#allocation3], 128, 128, 8
    $region5: #{tpu_custom_call.1} parent=1 // pred_fallthru
      _
    // Predicated region
    $region6: #{tpu_custom_call.1} parent=1 // pred_check
      _
    $region7: #{tpu_custom_call.1} parent=1 // pred_check_branch
      %25 = sbr.rel (0) target = $region9
    $region8: #{tpu_custom_call.1} parent=1 // pred_region
      %27 = vsyncadd [#allocation6], 0
      %s29 = sshll.u32 %s1, 4
      %s30 = int_to_ptr.hbm [resolvable:$true] %s29
      %s31 = sshll.u32 [#allocation5], 4
      %s32 = int_to_ptr.vmem [resolvable:$true] %s31
      %34 = dma.hbm_to_vmem [thread:$0]  %s30, 32, %s32, [#allocation6]
    $region9: #{tpu_custom_call.1} parent=1 // pred_fallthru
      _
    // Predicated region
    $region10: #{tpu_custom_call.1} parent=1 // pred_check
      _
    $region11: #{tpu_custom_call.1} parent=1 // pred_check_branch
      %36 = sbr.rel (0) target = $region13
    $region12: #{tpu_custom_call.1} parent=1 // pred_region
      %38 = vsyncadd [#allocation6], 0
      %s40 = sshll.u32 %s2, 4
      %s41 = int_to_ptr.hbm [resolvable:$true] %s40
      %s42 = sshll.u32 [#allocation7], 4
      %s43 = int_to_ptr.vmem [resolvable:$true] %s42
      %45 = dma.hbm_to_vmem [thread:$0]  %s41, 32, %s43, [#allocation6]
    $region13: #{tpu_custom_call.1} parent=1 // pred_fallthru
      _
    // Predicated region
    $region14: #{tpu_custom_call.1} parent=1 // pred_check
      _
    $region15: #{tpu_custom_call.1} parent=1 // pred_check_branch
      %47 = sbr.rel (0) target = $region17
    $region16: #{tpu_custom_call.1} parent=1 // pred_region
      %49 = dma.done [#allocation3], 256
    $region17: #{tpu_custom_call.1} parent=1 // pred_fallthru
      _
    // Predicated region
    $region18: #{tpu_custom_call.1} parent=1 // pred_check
      _
    $region19: #{tpu_custom_call.1} parent=1 // pred_check_branch
      %51 = sbr.rel (0) target = $region21
    $region20: #{tpu_custom_call.1} parent=1 // pred_region
      %53 = dma.done [#allocation6], 32
    $region21: #{tpu_custom_call.1} parent=1 // pred_fallthru
      _
    // Predicated region
    $region22: #{tpu_custom_call.1} parent=1 // pred_check
      _
    $region23: #{tpu_custom_call.1} parent=1 // pred_check_branch
      %55 = sbr.rel (0) target = $region25
    $region24: #{tpu_custom_call.1} parent=1 // pred_region
      %57 = dma.done [#allocation6], 32
    $region25: #{tpu_custom_call.1} parent=1 // pred_fallthru
      _
    %v58 = vld [vmem:[#allocation5] sm:$0x3]
    %v59 = vld [vmem:[#allocation7] sm:$0x3]
    %v60 = vlaneseq
    %v61 = vshrl.u32 %v60, 7
    %v62 = vadd.s32 %v61, 8
    %v63 = vadd.s32 %v61, 16
    %v64 = vadd.s32 %v61, 24
    %v65 = vadd.s32 %v61, 32
    %v66 = vadd.s32 %v61, 40
    %v67 = vadd.s32 %v61, 48
    %v68 = vadd.s32 %v61, 56
    %v69 = vadd.s32 %v61, 64
    %v70 = vadd.s32 %v61, 72
    %v71 = vadd.s32 %v61, 80
    %v72 = vadd.s32 %v61, 88
    %v73 = vadd.s32 %v61, 96
    %v74 = vadd.s32 %v61, 104
    %v75 = vadd.s32 %v61, 112
    %v76 = vadd.s32 %v61, 120
    %v77 = vadd.s32 %v61, 128
    %v78 = vadd.s32 %v61, 136
    %v79 = vadd.s32 %v61, 144
    %v80 = vadd.s32 %v61, 152
    %v81 = vadd.s32 %v61, 160
    %v82 = vadd.s32 %v61, 168
    %v83 = vadd.s32 %v61, 176
    %v84 = vadd.s32 %v61, 184
    %v85 = vadd.s32 %v61, 192
    %v86 = vadd.s32 %v61, 200
    %v87 = vadd.s32 %v61, 208
    %v88 = vadd.s32 %v61, 216
    %v89 = vadd.s32 %v61, 224
    %v90 = vadd.s32 %v61, 232
    %v91 = vadd.s32 %v61, 240
    %v92 = vadd.s32 %v61, 248
    %v93 = vperm.slane %v59, 0
    %v94 = vperm.slane %v59, 1
    %vm95 = vcmp.eq.s32.totalorder %v61, %v93
    %vm96 = vcmp.eq.s32.totalorder %v61, %v94
    %vm97 = vcmp.eq.s32.totalorder %v62, %v93
    %vm98 = vcmp.eq.s32.totalorder %v62, %v94
    %vm99 = vcmp.eq.s32.totalorder %v63, %v93
    %vm100 = vcmp.eq.s32.totalorder %v63, %v94
    %vm101 = vcmp.eq.s32.totalorder %v64, %v93
    %vm102 = vcmp.eq.s32.totalorder %v64, %v94
    %vm103 = vcmp.eq.s32.totalorder %v65, %v93
    %vm104 = vcmp.eq.s32.totalorder %v65, %v94
    %vm105 = vcmp.eq.s32.totalorder %v66, %v93
    %vm106 = vcmp.eq.s32.totalorder %v66, %v94
    %vm107 = vcmp.eq.s32.totalorder %v67, %v93
    %vm108 = vcmp.eq.s32.totalorder %v67, %v94
    %vm109 = vcmp.eq.s32.totalorder %v68, %v93
    %vm110 = vcmp.eq.s32.totalorder %v68, %v94
    %vm111 = vcmp.eq.s32.totalorder %v69, %v93
    %vm112 = vcmp.eq.s32.totalorder %v69, %v94
    %vm113 = vcmp.eq.s32.totalorder %v70, %v93
    %vm114 = vcmp.eq.s32.totalorder %v70, %v94
    %vm115 = vcmp.eq.s32.totalorder %v71, %v93
    %vm116 = vcmp.eq.s32.totalorder %v71, %v94
    %vm117 = vcmp.eq.s32.totalorder %v72, %v93
    %vm118 = vcmp.eq.s32.totalorder %v72, %v94
    %vm119 = vcmp.eq.s32.totalorder %v73, %v93
    %vm120 = vcmp.eq.s32.totalorder %v73, %v94
    %vm121 = vcmp.eq.s32.totalorder %v74, %v93
    %vm122 = vcmp.eq.s32.totalorder %v74, %v94
    %vm123 = vcmp.eq.s32.totalorder %v75, %v93
    %vm124 = vcmp.eq.s32.totalorder %v75, %v94
    %vm125 = vcmp.eq.s32.totalorder %v76, %v93
    %vm126 = vcmp.eq.s32.totalorder %v76, %v94
    %vm127 = vcmp.eq.s32.totalorder %v77, %v93
    %vm128 = vcmp.eq.s32.totalorder %v77, %v94
    %vm129 = vcmp.eq.s32.totalorder %v78, %v93
    %vm130 = vcmp.eq.s32.totalorder %v78, %v94
    %vm131 = vcmp.eq.s32.totalorder %v79, %v93
    %vm132 = vcmp.eq.s32.totalorder %v79, %v94
    %vm133 = vcmp.eq.s32.totalorder %v80, %v93
    %vm134 = vcmp.eq.s32.totalorder %v80, %v94
    %vm135 = vcmp.eq.s32.totalorder %v81, %v93
    %vm136 = vcmp.eq.s32.totalorder %v81, %v94
    %vm137 = vcmp.eq.s32.totalorder %v82, %v93
    %vm138 = vcmp.eq.s32.totalorder %v82, %v94
    %vm139 = vcmp.eq.s32.totalorder %v83, %v93
    %vm140 = vcmp.eq.s32.totalorder %v83, %v94
    %vm141 = vcmp.eq.s32.totalorder %v84, %v93
    %vm142 = vcmp.eq.s32.totalorder %v84, %v94
    %vm143 = vcmp.eq.s32.totalorder %v85, %v93
    %vm144 = vcmp.eq.s32.totalorder %v85, %v94
    %vm145 = vcmp.eq.s32.totalorder %v86, %v93
    %vm146 = vcmp.eq.s32.totalorder %v86, %v94
    %vm147 = vcmp.eq.s32.totalorder %v87, %v93
    %vm148 = vcmp.eq.s32.totalorder %v87, %v94
    %vm149 = vcmp.eq.s32.totalorder %v88, %v93
    %vm150 = vcmp.eq.s32.totalorder %v88, %v94
    %vm151 = vcmp.eq.s32.totalorder %v89, %v93
    %vm152 = vcmp.eq.s32.totalorder %v89, %v94
    %vm153 = vcmp.eq.s32.totalorder %v90, %v93
    %vm154 = vcmp.eq.s32.totalorder %v90, %v94
    %vm155 = vcmp.eq.s32.totalorder %v91, %v93
    %vm156 = vcmp.eq.s32.totalorder %v91, %v94
    %vm157 = vcmp.eq.s32.totalorder %v92, %v93
    %vm158 = vcmp.eq.s32.totalorder %v92, %v94
    %v159 = vsel %vm95, 1, 0
    %v160 = vsel %vm96, 1, 0
    %v161 = vsel %vm97, 1, 0
    %v162 = vsel %vm98, 1, 0
    %v163 = vsel %vm99, 1, 0
    %v164 = vsel %vm100, 1, 0
    %v165 = vsel %vm101, 1, 0
    %v166 = vsel %vm102, 1, 0
    %v167 = vsel %vm103, 1, 0
    %v168 = vsel %vm104, 1, 0
    %v169 = vsel %vm105, 1, 0
    %v170 = vsel %vm106, 1, 0
    %v171 = vsel %vm107, 1, 0
    %v172 = vsel %vm108, 1, 0
    %v173 = vsel %vm109, 1, 0
    %v174 = vsel %vm110, 1, 0
    %v175 = vsel %vm111, 1, 0
    %v176 = vsel %vm112, 1, 0
    %v177 = vsel %vm113, 1, 0
    %v178 = vsel %vm114, 1, 0
    %v179 = vsel %vm115, 1, 0
    %v180 = vsel %vm116, 1, 0
    %v181 = vsel %vm117, 1, 0
    %v182 = vsel %vm118, 1, 0
    %v183 = vsel %vm119, 1, 0
    %v184 = vsel %vm120, 1, 0
    %v185 = vsel %vm121, 1, 0
    %v186 = vsel %vm122, 1, 0
    %v187 = vsel %vm123, 1, 0
    %v188 = vsel %vm124, 1, 0
    %v189 = vsel %vm125, 1, 0
    %v190 = vsel %vm126, 1, 0
    %v191 = vsel %vm127, 1, 0
    %v192 = vsel %vm128, 1, 0
    %v193 = vsel %vm129, 1, 0
    %v194 = vsel %vm130, 1, 0
    %v195 = vsel %vm131, 1, 0
    %v196 = vsel %vm132, 1, 0
    %v197 = vsel %vm133, 1, 0
    %v198 = vsel %vm134, 1, 0
    %v199 = vsel %vm135, 1, 0
    %v200 = vsel %vm136, 1, 0
    %v201 = vsel %vm137, 1, 0
    %v202 = vsel %vm138, 1, 0
    %v203 = vsel %vm139, 1, 0
    %v204 = vsel %vm140, 1, 0
    %v205 = vsel %vm141, 1, 0
    %v206 = vsel %vm142, 1, 0
    %v207 = vsel %vm143, 1, 0
    %v208 = vsel %vm144, 1, 0
    %v209 = vsel %vm145, 1, 0
    %v210 = vsel %vm146, 1, 0
    %v211 = vsel %vm147, 1, 0
    %v212 = vsel %vm148, 1, 0
    %v213 = vsel %vm149, 1, 0
    %v214 = vsel %vm150, 1, 0
    %v215 = vsel %vm151, 1, 0
    %v216 = vsel %vm152, 1, 0
    %v217 = vsel %vm153, 1, 0
    %v218 = vsel %vm154, 1, 0
    %v219 = vsel %vm155, 1, 0
    %v220 = vsel %vm156, 1, 0
    %v221 = vsel %vm157, 1, 0
    %v222 = vsel %vm158, 1, 0
    %v223 = vcvt.s32.f32 %v159
    %v224 = vcvt.s32.f32 %v160
    %v225 = vcvt.s32.f32 %v161
    %v226 = vcvt.s32.f32 %v162
    %v227 = vcvt.s32.f32 %v163
    %v228 = vcvt.s32.f32 %v164
    %v229 = vcvt.s32.f32 %v165
    %v230 = vcvt.s32.f32 %v166
    %v231 = vcvt.s32.f32 %v167
    %v232 = vcvt.s32.f32 %v168
    %v233 = vcvt.s32.f32 %v169
    %v234 = vcvt.s32.f32 %v170
    %v235 = vcvt.s32.f32 %v171
    %v236 = vcvt.s32.f32 %v172
    %v237 = vcvt.s32.f32 %v173
    %v238 = vcvt.s32.f32 %v174
    %v239 = vcvt.s32.f32 %v175
    %v240 = vcvt.s32.f32 %v176
    %v241 = vcvt.s32.f32 %v177
    %v242 = vcvt.s32.f32 %v178
    %v243 = vcvt.s32.f32 %v179
    %v244 = vcvt.s32.f32 %v180
    %v245 = vcvt.s32.f32 %v181
    %v246 = vcvt.s32.f32 %v182
    %v247 = vcvt.s32.f32 %v183
    %v248 = vcvt.s32.f32 %v184
    %v249 = vcvt.s32.f32 %v185
    %v250 = vcvt.s32.f32 %v186
    %v251 = vcvt.s32.f32 %v187
    %v252 = vcvt.s32.f32 %v188
    %v253 = vcvt.s32.f32 %v189
    %v254 = vcvt.s32.f32 %v190
    %v255 = vcvt.s32.f32 %v191
    %v256 = vcvt.s32.f32 %v192
    %v257 = vcvt.s32.f32 %v193
    %v258 = vcvt.s32.f32 %v194
    %v259 = vcvt.s32.f32 %v195
    %v260 = vcvt.s32.f32 %v196
    %v261 = vcvt.s32.f32 %v197
    %v262 = vcvt.s32.f32 %v198
    %v263 = vcvt.s32.f32 %v199
    %v264 = vcvt.s32.f32 %v200
    %v265 = vcvt.s32.f32 %v201
    %v266 = vcvt.s32.f32 %v202
    %v267 = vcvt.s32.f32 %v203
    %v268 = vcvt.s32.f32 %v204
    %v269 = vcvt.s32.f32 %v205
    %v270 = vcvt.s32.f32 %v206
    %v271 = vcvt.s32.f32 %v207
    %v272 = vcvt.s32.f32 %v208
    %v273 = vcvt.s32.f32 %v209
    %v274 = vcvt.s32.f32 %v210
    %v275 = vcvt.s32.f32 %v211
    %v276 = vcvt.s32.f32 %v212
    %v277 = vcvt.s32.f32 %v213
    %v278 = vcvt.s32.f32 %v214
    %v279 = vcvt.s32.f32 %v215
    %v280 = vcvt.s32.f32 %v216
    %v281 = vcvt.s32.f32 %v217
    %v282 = vcvt.s32.f32 %v218
    %v283 = vcvt.s32.f32 %v219
    %v284 = vcvt.s32.f32 %v220
    %v285 = vcvt.s32.f32 %v221
    %v286 = vcvt.s32.f32 %v222
    %v287 = vpack.c.bf16 %v225, %v223
    %v288 = vpack.c.bf16 %v226, %v224
    %v289 = vpack.c.bf16 %v229, %v227
    %v290 = vpack.c.bf16 %v230, %v228
    %v291 = vpack.c.bf16 %v233, %v231
    %v292 = vpack.c.bf16 %v234, %v232
    %v293 = vpack.c.bf16 %v237, %v235
    %v294 = vpack.c.bf16 %v238, %v236
    %v295 = vpack.c.bf16 %v241, %v239
    %v296 = vpack.c.bf16 %v242, %v240
    %v297 = vpack.c.bf16 %v245, %v243
    %v298 = vpack.c.bf16 %v246, %v244
    %v299 = vpack.c.bf16 %v249, %v247
    %v300 = vpack.c.bf16 %v250, %v248
    %v301 = vpack.c.bf16 %v253, %v251
    %v302 = vpack.c.bf16 %v254, %v252
    %v303 = vpack.c.bf16 %v257, %v255
    %v304 = vpack.c.bf16 %v258, %v256
    %v305 = vpack.c.bf16 %v261, %v259
    %v306 = vpack.c.bf16 %v262, %v260
    %v307 = vpack.c.bf16 %v265, %v263
    %v308 = vpack.c.bf16 %v266, %v264
    %v309 = vpack.c.bf16 %v269, %v267
    %v310 = vpack.c.bf16 %v270, %v268
    %v311 = vpack.c.bf16 %v273, %v271
    %v312 = vpack.c.bf16 %v274, %v272
    %v313 = vpack.c.bf16 %v277, %v275
    %v314 = vpack.c.bf16 %v278, %v276
    %v315 = vpack.c.bf16 %v281, %v279
    %v316 = vpack.c.bf16 %v282, %v280
    %v317 = vpack.c.bf16 %v285, %v283
    %v318 = vpack.c.bf16 %v286, %v284
    %v319 = vld [vmem:[#allocation2] sm:$0xff]
    %v320 = vld [vmem:[#allocation2 + $0x8] sm:$0xff]
    %v323 = vunpack.c.l.b16 %v319
    %v324 = vunpack.c.h.b16 %v319
    %v325 = vunpack.c.l.b16 %v320
    %v326 = vunpack.c.h.b16 %v320
    %v327 = vpack.c.b16 %v325, %v323
    %v328 = vpack.c.b16 %v326, %v324
    %331 = vmatpush.bf16.msra.mxu0 %v301
    %332 = vmatpush.bf16.msra.mxu0 %v299
    %333 = vmatpush.bf16.msra.mxu0 %v297
    %334 = vmatpush.bf16.msra.mxu0 %v295
    %335 = vmatpush.bf16.msra.mxu0 %v293
    %336 = vmatpush.bf16.msra.mxu0 %v291
    %337 = vmatpush.bf16.msra.mxu0 %v289
    %338 = vmatpush.bf16.msra.mxu0 %v287
    %339 = vmatmul.bf16.gmra.mxu0 %v327
    %v340 = vpop.f32.mrf.mxu0
    %v341 = vadd.f32 0.0, %v340
    %v342 = vpop.f32.mrf.mxu0
    %v343 = vadd.f32 0.0, %v342
    %344 = vdwg.mxu0
    %345 = vmatpush.bf16.msra.mxu0 %v317
    %346 = vmatpush.bf16.msra.mxu0 %v315
    %347 = vmatpush.bf16.msra.mxu0 %v313
    %348 = vmatpush.bf16.msra.mxu0 %v311
    %349 = vmatpush.bf16.msra.mxu0 %v309
    %350 = vmatpush.bf16.msra.mxu0 %v307
    %351 = vmatpush.bf16.msra.mxu0 %v305
    %352 = vmatpush.bf16.msra.mxu0 %v303
    %353 = vmatmul.bf16.gmra.mxu0 %v328
    %v354 = vpop.f32.mrf.mxu0
    %v355 = vadd.f32 %v341, %v354
    %v356 = vpop.f32.mrf.mxu0
    %v357 = vadd.f32 %v343, %v356
    %358 = vdwg.mxu0
    %359 = vmatpush.bf16.msra.mxu0 %v302
    %360 = vmatpush.bf16.msra.mxu0 %v300
    %361 = vmatpush.bf16.msra.mxu0 %v298
    %362 = vmatpush.bf16.msra.mxu0 %v296
    %363 = vmatpush.bf16.msra.mxu0 %v294
    %364 = vmatpush.bf16.msra.mxu0 %v292
    %365 = vmatpush.bf16.msra.mxu0 %v290
    %366 = vmatpush.bf16.msra.mxu0 %v288
    %367 = vmatmul.bf16.gmra.mxu0 %v327
    %v368 = vpop.f32.mrf.mxu0
    %v369 = vadd.f32 0.0, %v368
    %v370 = vpop.f32.mrf.mxu0
    %v371 = vadd.f32 0.0, %v370
    %372 = vdwg.mxu0
    %373 = vmatpush.bf16.msra.mxu0 %v318
    %374 = vmatpush.bf16.msra.mxu0 %v316
    %375 = vmatpush.bf16.msra.mxu0 %v314
    %376 = vmatpush.bf16.msra.mxu0 %v312
    %377 = vmatpush.bf16.msra.mxu0 %v310
    %378 = vmatpush.bf16.msra.mxu0 %v308
    %379 = vmatpush.bf16.msra.mxu0 %v306
    %380 = vmatpush.bf16.msra.mxu0 %v304
    %381 = vmatmul.bf16.gmra.mxu0 %v328
    %v382 = vpop.f32.mrf.mxu0
    %v383 = vadd.f32 %v369, %v382
    %v384 = vpop.f32.mrf.mxu0
    %v385 = vadd.f32 %v371, %v384
    %386 = vdwg.mxu0
    %v389 = vrot.slane %v355, 1
    %v390 = vrot.slane %v383, 1
    %v393 = vadd.f32 %v355, %v389
    %v394 = vadd.f32 %v383, %v390
    %v395 = vrot.slane %v355, 2
    %v396 = vrot.slane %v383, 2
    %v399 = vadd.f32 %v393, %v395
    %v400 = vadd.f32 %v394, %v396
    %v403 = vrot.slane %v357, 2
    %v404 = vrot.slane %v385, 2
    %v407 = vadd.f32 %v393, %v403
    %v408 = vadd.f32 %v394, %v404
    %v411 = vrot.slane %v400, 7
    %vm412 = vcmask 1040384
    %v413 = vsel %vm412, %v399, %v411
    %v415 = vsub.f32 %v58, %v413
    %418 = vst [vmem:[#allocation1] sm:$0xff] %v407
    %419 = vst [vmem:[#allocation1 + $0x9] sm:$0xff] %v408
    %s420 = scalar_lea.vmem [#allocation1], 6
    %v421 = vld [vmem:[%s420] ss:$9 sm:$0xff]
    %v423 = vmul.f32 %v415, %v421
    %v425 = vperm.slane %v423, 0
    %v426 = vperm.slane %v423, 1
    %v429 = vadd.f32 %v399, %v425
    %v430 = vadd.f32 %v400, %v426
    %433 = vst [vmem:[#allocation1] sm:$0xff] %v429
    %434 = vst [vmem:[#allocation1 + $0x9] sm:$0xff] %v430
    %s435 = scalar_lea.vmem [#allocation1], 3
    %v436 = vld [vmem:[%s435] ss:$9 sm:$0xff]
    %v438 = vlaneseq
    %vm439 = vcmp.ge.s32.totalorder %v438, 0
    %vm440 = vcmp.lt.s32.totalorder %v438, 256
    %vm441 = vmand %vm439, %vm440
    %442 = vst.msk [vmem:[#allocation8] sm:$0x3] %vm441, %v436
    // Predicated region
    $region26: #{tpu_custom_call.1} parent=1 // pred_check
      _
    $region27: #{tpu_custom_call.1} parent=1 // pred_check_branch
      %444 = sbr.rel (0) target = $region29
    $region28: #{tpu_custom_call.1} parent=1 // pred_region
      %446 = vsyncadd [#allocation4], 0
      %s448 = sshll.u32 [#allocation8], 4
      %s449 = int_to_ptr.vmem [resolvable:$true] %s448
      %s450 = sshll.u32 %s3, 4
      %s451 = int_to_ptr.hbm [resolvable:$true] %s450
      %453 = dma.vmem_to_hbm [thread:$0]  %s449, 32, %s451, [#allocation4]
    $region29: #{tpu_custom_call.1} parent=1 // pred_fallthru
      _
    // Predicated region
    $region30: #{tpu_custom_call.1} parent=1 // pred_check
      _
    $region31: #{tpu_custom_call.1} parent=1 // pred_check_branch
      %455 = sbr.rel (0) target = $region33
    $region32: #{tpu_custom_call.1} parent=1 // pred_region
      %457 = dma.done [#allocation4], 32
    $region33: #{tpu_custom_call.1} parent=1 // pred_fallthru
      _
    %458 = vsyncpa [#allocation3], 1
    %459 = vsyncpa [#allocation6], 1
    %460 = vsyncpa [#allocation4], 1

</llo_original>
